<compile_context>
chip_gen: v7x
topology: tpu7x:2x2x1
jax: 0.10.0
libtpu: 0.0.40
codegen_flags: <defaults>
</compile_context>

<pallas_src>
import jax
import jax.numpy as jnp
from jax.experimental import pallas as pl
from jax.experimental.pallas import tpu as pltpu

LANE = 128
SUBLANE = 8


def _round_up(x, m):
    return (x + m - 1) // m * m


def actor_kernel(x_ref, w1_ref, b1_ref, w2_ref, b2_ref, w3_ref, b3_ref, o_ref):
    # fc1 + ReLU  (bf16 operands on the MXU, f32 accumulate + f32 epilogue)
    x = x_ref[...].astype(jnp.bfloat16)
    h1 = jnp.dot(x, w1_ref[...], preferred_element_type=jnp.float32)
    h1 = jnp.maximum(h1 + b1_ref[...], 0.0)
    # fc2 + ReLU
    h2 = jnp.dot(h1.astype(jnp.bfloat16), w2_ref[...],
                 preferred_element_type=jnp.float32)
    h2 = jnp.maximum(h2 + b2_ref[...], 0.0)
    # action_head (unpadded: N = action_size * 3 = 18 lanes)
    logits = jnp.dot(h2.astype(jnp.bfloat16), w3_ref[...],
                     preferred_element_type=jnp.float32)
    o_ref[...] = (logits + b3_ref[...]).astype(o_ref.dtype)


def actor_forward(state, params, *, block_b=4096):
    """Run the Actor forward pass. Returns logits with shape (-1, 6, 3)."""
    w1, b1, w2, b2, w3, b3 = params
    B, S = state.shape
    H = w1.shape[1]
    A3 = w3.shape[1]  # action_size * 3

    # --- batch row-blocking (no wrapper pad; ragged last block is masked) ---
    bb = min(block_b, _round_up(B, SUBLANE))
    # v7x megacore: prefer >=2 grid steps for medium/large batches so the
    # ("parallel",) axis actually shards across both TensorCores.
    if B > 2 * SUBLANE and pl.cdiv(B, bb) < 2:
        bb = _round_up(pl.cdiv(B, 2), SUBLANE)
    grid = (pl.cdiv(B, bb),)

    nbytes = lambda a: a.size * a.dtype.itemsize
    cost = pl.CostEstimate(
        flops=2 * B * (S * H + H * H + H * A3),
        transcendentals=0,
        bytes_accessed=(nbytes(state) + nbytes(w1) + nbytes(b1) + nbytes(w2)
                        + nbytes(b2) + nbytes(w3) + nbytes(b3)
                        + B * A3 * 4),
    )

    full = lambda shape: pl.BlockSpec(shape, lambda i: tuple(0 for _ in shape))

    out = pl.pallas_call(
        actor_kernel,
        out_shape=jax.ShapeDtypeStruct((B, A3), jnp.float32),
        grid_spec=pltpu.PrefetchScalarGridSpec(
            num_scalar_prefetch=0,
            grid=grid,
            in_specs=[
                pl.BlockSpec((bb, S), lambda i: (i, 0)),  # state rows, blocked
                full((S, H)), full((1, H)),               # fc1 (resident)
                full((H, H)), full((1, H)),               # fc2 (resident)
                full((H, A3)), full((1, A3)),             # action_head (resident)
            ],
            out_specs=pl.BlockSpec((bb, A3), lambda i: (i, 0)),
        ),
        compiler_params=pltpu.CompilerParams(
            dimension_semantics=("parallel",)),
        cost_estimate=cost,
    )(state, w1, b1, w2, b2, w3, b3)

    # PyTorch's view(-1, 6, 3).
    assert A3 == 18, "view(-1, 6, 3) implies action_size == 6 (18 logits/sample)"
    return out.reshape(-1, 6, 3)


def init_actor_params(key, state_size, action_size, hidden_size=128):
    """Deterministic init mirroring the PyTorch module's reset_parameters().

    hidden_init uses fan_in = weight.size()[0] == out_features (as written in
    the reference), so lim = 1/sqrt(hidden_size) for fc1/fc2. action_head
    weights ~ U(-3e-3, 3e-3). Biases use PyTorch Linear default
    U(-1/sqrt(in_features), 1/sqrt(in_features)) (not touched by reset).
    Weights returned as (in, out) = PyTorch weight.T, stored in bfloat16;
    biases stay float32 (added on the f32 accumulator).
    """
    k = jax.random.split(key, 6)
    lim_h = 1.0 / jnp.sqrt(jnp.float32(hidden_size))

    w1 = jax.random.uniform(k[0], (state_size, hidden_size), jnp.float32,
                            -lim_h, lim_h).astype(jnp.bfloat16)
    b1 = jax.random.uniform(k[1], (1, hidden_size), jnp.float32,
                            -1.0 / jnp.sqrt(jnp.float32(state_size)),
                            1.0 / jnp.sqrt(jnp.float32(state_size)))

    w2 = jax.random.uniform(k[2], (hidden_size, hidden_size), jnp.float32,
                            -lim_h, lim_h).astype(jnp.bfloat16)
    b2 = jax.random.uniform(k[3], (1, hidden_size), jnp.float32,
                            -1.0 / jnp.sqrt(jnp.float32(hidden_size)),
                            1.0 / jnp.sqrt(jnp.float32(hidden_size)))

    w3 = jax.random.uniform(k[4], (hidden_size, action_size * 3), jnp.float32,
                            -0.003, 0.003).astype(jnp.bfloat16)
    b3 = jax.random.uniform(k[5], (1, action_size * 3), jnp.float32,
                            -1.0 / jnp.sqrt(jnp.float32(hidden_size)),
                            1.0 / jnp.sqrt(jnp.float32(hidden_size)))

    return (w1, b1, w2, b2, w3, b3)


if __name__ == "__main__":
    # Small shapes consistent with the module: view(-1, 6, 3) in forward
    # implies action_size == 6 (6 * 3 = 18 logits per sample).
    batch = 8
    state_size = 32
    action_size = 6
    hidden_size = 128

    key = jax.random.PRNGKey(0)
    k_params, k_state = jax.random.split(key)

    params = init_actor_params(k_params, state_size, action_size, hidden_size)
    state = jax.random.normal(k_state, (batch, state_size), dtype=jnp.float32)

    logits = actor_forward(state, params)
    jax.block_until_ready(logits)

    # Reference in plain JAX, mirroring the kernel's dtype path
    # (bf16 matmul operands, f32 accumulation, f32 bias/ReLU epilogue).
    w1, b1, w2, b2, w3, b3 = params
    h1 = jnp.maximum(
        jnp.dot(state.astype(jnp.bfloat16), w1,
                preferred_element_type=jnp.float32) + b1, 0.0)
    h2 = jnp.maximum(
        jnp.dot(h1.astype(jnp.bfloat16), w2,
                preferred_element_type=jnp.float32) + b2, 0.0)
    ref = (jnp.dot(h2.astype(jnp.bfloat16), w3,
                   preferred_element_type=jnp.float32) + b3).reshape(-1, 6, 3)

    assert logits.shape == (batch, 6, 3), logits.shape
    assert jnp.allclose(logits, ref, atol=1e-4, rtol=1e-4)

    # Also exercise a batch that is NOT a multiple of the sublane/block size to
    # confirm the ragged-last-block (masked) path.
    batch2 = 13
    state2 = jax.random.normal(jax.random.PRNGKey(1), (batch2, state_size),
                               dtype=jnp.float32)
    logits2 = actor_forward(state2, params)
    jax.block_until_ready(logits2)
    h1 = jnp.maximum(
        jnp.dot(state2.astype(jnp.bfloat16), w1,
                preferred_element_type=jnp.float32) + b1, 0.0)
    h2 = jnp.maximum(
        jnp.dot(h1.astype(jnp.bfloat16), w2,
                preferred_element_type=jnp.float32) + b2, 0.0)
    ref2 = (jnp.dot(h2.astype(jnp.bfloat16), w3,
                    preferred_element_type=jnp.float32) + b3).reshape(-1, 6, 3)
    assert logits2.shape == (batch2, 6, 3), logits2.shape
    assert jnp.allclose(logits2, ref2, atol=1e-4, rtol=1e-4)

    print("KERNEL_OK")
</pallas_src>

<mosaic_0001>
module attributes {stable_mosaic.version = 11 : i64} {
  func.func @actor_kernel(%arg0: i32, %arg1: memref<8x32xf32, #tpu.memory_space<vmem>>, %arg2: memref<32x128xbf16, #tpu.memory_space<vmem>>, %arg3: memref<1x128xf32, #tpu.memory_space<vmem>>, %arg4: memref<128x128xbf16, #tpu.memory_space<vmem>>, %arg5: memref<1x128xf32, #tpu.memory_space<vmem>>, %arg6: memref<128x18xbf16, #tpu.memory_space<vmem>>, %arg7: memref<1x18xf32, #tpu.memory_space<vmem>>, %arg8: memref<8x18xf32, #tpu.memory_space<vmem>>) attributes {dimension_semantics = [#tpu.dimension_semantics<parallel>], iteration_bounds = array<i64: 1>, scalar_prefetch = 0 : i64, scratch_operands = 0 : i64, tpu.core_type = #tpu.core_type<tc>, window_params = [{transform_indices = @transform_0, window_bounds = array<i64: 8, 32>}, {pipeline_mode = #tpu.pipeline_mode<synchronous>, transform_indices = @transform_1, window_bounds = array<i64: 32, 128>}, {pipeline_mode = #tpu.pipeline_mode<synchronous>, transform_indices = @transform_2, window_bounds = array<i64: 1, 128>}, {pipeline_mode = #tpu.pipeline_mode<synchronous>, transform_indices = @transform_3, window_bounds = array<i64: 128, 128>}, {pipeline_mode = #tpu.pipeline_mode<synchronous>, transform_indices = @transform_4, window_bounds = array<i64: 1, 128>}, {pipeline_mode = #tpu.pipeline_mode<synchronous>, transform_indices = @transform_5, window_bounds = array<i64: 128, 18>}, {pipeline_mode = #tpu.pipeline_mode<synchronous>, transform_indices = @transform_6, window_bounds = array<i64: 1, 18>}, {transform_indices = @transform_7, window_bounds = array<i64: 8, 18>}]} {
    %c0 = arith.constant 0 : index
    %c0_0 = arith.constant 0 : index
    %0 = vector.load %arg1[%c0, %c0_0] : memref<8x32xf32, #tpu.memory_space<vmem>>, vector<8x32xf32>
    %1 = arith.truncf %0 : vector<8x32xf32> to vector<8x32xbf16>
    %c0_1 = arith.constant 0 : index
    %c0_2 = arith.constant 0 : index
    %2 = vector.load %arg2[%c0_1, %c0_2] : memref<32x128xbf16, #tpu.memory_space<vmem>>, vector<32x128xbf16>
    %cst = arith.constant dense<0.000000e+00> : vector<8x128xf32>
    %3 = tpu.matmul %1, %2, %cst {dimension_numbers = #tpu.dot_dimension_numbers<[1], [0], [0], [1], [0, 0, 1, 1], [], []>} : vector<8x32xbf16>, vector<32x128xbf16>, vector<8x128xf32> -> vector<8x128xf32>
    %c0_3 = arith.constant 0 : index
    %c0_4 = arith.constant 0 : index
    %4 = vector.load %arg3[%c0_3, %c0_4] : memref<1x128xf32, #tpu.memory_space<vmem>>, vector<1x128xf32>
    %5 = vector.broadcast %4 : vector<1x128xf32> to vector<8x128xf32>
    %6 = arith.addf %3, %5 : vector<8x128xf32>
    %cst_5 = arith.constant 0.000000e+00 : f32
    %7 = vector.broadcast %cst_5 : f32 to vector<8x128xf32>
    %8 = arith.maximumf %6, %7 : vector<8x128xf32>
    %9 = arith.truncf %8 : vector<8x128xf32> to vector<8x128xbf16>
    %c0_6 = arith.constant 0 : index
    %c0_7 = arith.constant 0 : index
    %10 = vector.load %arg4[%c0_6, %c0_7] : memref<128x128xbf16, #tpu.memory_space<vmem>>, vector<128x128xbf16>
    %cst_8 = arith.constant dense<0.000000e+00> : vector<8x128xf32>
    %11 = tpu.matmul %9, %10, %cst_8 {dimension_numbers = #tpu.dot_dimension_numbers<[1], [0], [0], [1], [0, 0, 1, 1], [], []>} : vector<8x128xbf16>, vector<128x128xbf16>, vector<8x128xf32> -> vector<8x128xf32>
    %c0_9 = arith.constant 0 : index
    %c0_10 = arith.constant 0 : index
    %12 = vector.load %arg5[%c0_9, %c0_10] : memref<1x128xf32, #tpu.memory_space<vmem>>, vector<1x128xf32>
    %13 = vector.broadcast %12 : vector<1x128xf32> to vector<8x128xf32>
    %14 = arith.addf %11, %13 : vector<8x128xf32>
    %cst_11 = arith.constant 0.000000e+00 : f32
    %15 = vector.broadcast %cst_11 : f32 to vector<8x128xf32>
    %16 = arith.maximumf %14, %15 : vector<8x128xf32>
    %17 = arith.truncf %16 : vector<8x128xf32> to vector<8x128xbf16>
    %c0_12 = arith.constant 0 : index
    %c0_13 = arith.constant 0 : index
    %18 = vector.load %arg6[%c0_12, %c0_13] : memref<128x18xbf16, #tpu.memory_space<vmem>>, vector<128x18xbf16>
    %cst_14 = arith.constant dense<0.000000e+00> : vector<8x18xf32>
    %19 = tpu.matmul %17, %18, %cst_14 {dimension_numbers = #tpu.dot_dimension_numbers<[1], [0], [0], [1], [0, 0, 1, 1], [], []>} : vector<8x128xbf16>, vector<128x18xbf16>, vector<8x18xf32> -> vector<8x18xf32>
    %c0_15 = arith.constant 0 : index
    %c0_16 = arith.constant 0 : index
    %20 = vector.load %arg7[%c0_15, %c0_16] : memref<1x18xf32, #tpu.memory_space<vmem>>, vector<1x18xf32>
    %21 = vector.broadcast %20 : vector<1x18xf32> to vector<8x18xf32>
    %22 = arith.addf %19, %21 : vector<8x18xf32>
    %c0_17 = arith.constant 0 : index
    %c0_18 = arith.constant 0 : index
    %23 = vector.load %arg8[%c0_17, %c0_18] : memref<8x18xf32, #tpu.memory_space<vmem>>, vector<8x18xf32>
    tpu.vector_store %arg8[%c0_17, %c0_18], %22 {strides = array<i32>} : memref<8x18xf32, #tpu.memory_space<vmem>>, vector<8x18xf32>,
    return
  }
  func.func @transform_0(%arg0: i32) -> (i32, i32) {
    %c0_i32 = arith.constant 0 : i32
    %c0_i32_0 = arith.constant 0 : i32
    return %arg0, %c0_i32 : i32, i32
  }
  func.func @transform_1(%arg0: i32) -> (i32, i32) {
    %c0_i32 = arith.constant 0 : i32
    %c0_i32_0 = arith.constant 0 : i32
    %c0_i32_1 = arith.constant 0 : i32
    return %c0_i32, %c0_i32_0 : i32, i32
  }
  func.func @transform_2(%arg0: i32) -> (i32, i32) {
    %c0_i32 = arith.constant 0 : i32
    %c0_i32_0 = arith.constant 0 : i32
    %c0_i32_1 = arith.constant 0 : i32
    return %c0_i32, %c0_i32_0 : i32, i32
  }
  func.func @transform_3(%arg0: i32) -> (i32, i32) {
    %c0_i32 = arith.constant 0 : i32
    %c0_i32_0 = arith.constant 0 : i32
    %c0_i32_1 = arith.constant 0 : i32
    return %c0_i32, %c0_i32_0 : i32, i32
  }
  func.func @transform_4(%arg0: i32) -> (i32, i32) {
    %c0_i32 = arith.constant 0 : i32
    %c0_i32_0 = arith.constant 0 : i32
    %c0_i32_1 = arith.constant 0 : i32
    return %c0_i32, %c0_i32_0 : i32, i32
  }
  func.func @transform_5(%arg0: i32) -> (i32, i32) {
    %c0_i32 = arith.constant 0 : i32
    %c0_i32_0 = arith.constant 0 : i32
    %c0_i32_1 = arith.constant 0 : i32
    return %c0_i32, %c0_i32_0 : i32, i32
  }
  func.func @transform_6(%arg0: i32) -> (i32, i32) {
    %c0_i32 = arith.constant 0 : i32
    %c0_i32_0 = arith.constant 0 : i32
    %c0_i32_1 = arith.constant 0 : i32
    return %c0_i32, %c0_i32_0 : i32, i32
  }
  func.func @transform_7(%arg0: i32) -> (i32, i32) {
    %c0_i32 = arith.constant 0 : i32
    %c0_i32_0 = arith.constant 0 : i32
    return %arg0, %c0_i32 : i32, i32
  }
}

</mosaic_0001>

<llo_original>
// kernel: tpu_custom_call.1
$region0: #{tpu_custom_call.1}
  #allocation0 [shape = 'u32[]', space=smem, size = 0x4, offset = 0x4, fixed_abs, tag = 'smem constant byte address 0x4 - core index']
  #allocation1 [shape = 'u32[144,128]{1,0:T(1,128)}', space=vmem, size = 0x12000, scoped, tag = 'internal scratch']
  %s0 = inlined_call_operand.hbm [shape: f32[8,32], index: 0, kind: input, shape index: {}]
  %s1 = inlined_call_operand.vmem [shape: bf16[32,128], index: 1, kind: input, shape index: {}]
  %s2 = inlined_call_operand.vmem [shape: f32[1,128], index: 2, kind: input, shape index: {}]
  %s3 = inlined_call_operand.vmem [shape: bf16[128,128], index: 3, kind: input, shape index: {}]
  %s4 = inlined_call_operand.vmem [shape: f32[1,128], index: 4, kind: input, shape index: {}]
  %s5 = inlined_call_operand.vmem [shape: bf16[128,18], index: 5, kind: input, shape index: {}]
  %s6 = inlined_call_operand.vmem [shape: f32[1,18], index: 6, kind: input, shape index: {}]
  %s7 = inlined_call_operand.hbm [shape: f32[8,18], index: 7, kind: output, shape index: {}]
  %s8 = sld [smem:[#allocation0]]
  $region42: #{tpu_custom_call.1} parent=0
    _
  %s10 = ssub.s32 1, %s8
  %s11 = scalar_select 0, %s10, %s8
  $region1: #{tpu_custom_call.1} parent=0
    #allocation2 [shape = 'u8[4096]{0}', space=vmem, size = 0x1000, scoped, tag = 'input window, operand 0, single buffered']
    #allocation3 [shape = 's32[1]{0}', space=sflag, size = 0x4, scoped, tag = 'scoped memory for tpu_custom_call.1']
    #allocation4 [shape = 's32[1]{0}', space=sflag, size = 0x4, scoped, tag = 'scoped memory for tpu_custom_call.1']
    #allocation5 [shape = 'u8[4096]{0}', space=vmem, size = 0x1000, scoped, tag = 'output window, operand 0, single buffered']
    %12 = vsyncpa [#allocation3], 0
    %13 = vsyncpa [#allocation4], 0
    // Predicated region
    $region2: #{tpu_custom_call.1} parent=1 // pred_check
      _
    $region3: #{tpu_custom_call.1} parent=1 // pred_check_branch
      %15 = sbr.rel (0) target = $region5
    $region4: #{tpu_custom_call.1} parent=1 // pred_region
      %s17 = ssub.s32 128, 128
      %18 = vsyncadd [#allocation3], %s17
      %s20 = sshll.u32 [#allocation2], 4
      %s21 = int_to_ptr.vmem [resolvable:$true] %s20
      %23 = dma.hbm_to_vmem [thread:$0]  %s0, 128, %s21, [#allocation3]
    $region5: #{tpu_custom_call.1} parent=1 // pred_fallthru
      _
    // Predicated region
    $region6: #{tpu_custom_call.1} parent=1 // pred_check
      _
    $region7: #{tpu_custom_call.1} parent=1 // pred_check_branch
      %25 = sbr.rel (0) target = $region9
    $region8: #{tpu_custom_call.1} parent=1 // pred_region
      _
    $region9: #{tpu_custom_call.1} parent=1 // pred_fallthru
      _
    // Predicated region
    $region10: #{tpu_custom_call.1} parent=1 // pred_check
      _
    $region11: #{tpu_custom_call.1} parent=1 // pred_check_branch
      %27 = sbr.rel (0) target = $region13
    $region12: #{tpu_custom_call.1} parent=1 // pred_region
      _
    $region13: #{tpu_custom_call.1} parent=1 // pred_fallthru
      _
    // Predicated region
    $region14: #{tpu_custom_call.1} parent=1 // pred_check
      _
    $region15: #{tpu_custom_call.1} parent=1 // pred_check_branch
      %29 = sbr.rel (0) target = $region17
    $region16: #{tpu_custom_call.1} parent=1 // pred_region
      _
    $region17: #{tpu_custom_call.1} parent=1 // pred_fallthru
      _
    // Predicated region
    $region18: #{tpu_custom_call.1} parent=1 // pred_check
      _
    $region19: #{tpu_custom_call.1} parent=1 // pred_check_branch
      %31 = sbr.rel (0) target = $region21
    $region20: #{tpu_custom_call.1} parent=1 // pred_region
      _
    $region21: #{tpu_custom_call.1} parent=1 // pred_fallthru
      _
    // Predicated region
    $region22: #{tpu_custom_call.1} parent=1 // pred_check
      _
    $region23: #{tpu_custom_call.1} parent=1 // pred_check_branch
      %33 = sbr.rel (0) target = $region25
    $region24: #{tpu_custom_call.1} parent=1 // pred_region
      _
    $region25: #{tpu_custom_call.1} parent=1 // pred_fallthru
      _
    // Predicated region
    $region26: #{tpu_custom_call.1} parent=1 // pred_check
      _
    $region27: #{tpu_custom_call.1} parent=1 // pred_check_branch
      %35 = sbr.rel (0) target = $region29
    $region28: #{tpu_custom_call.1} parent=1 // pred_region
      _
    $region29: #{tpu_custom_call.1} parent=1 // pred_fallthru
      _
    // Predicated region
    $region30: #{tpu_custom_call.1} parent=1 // pred_check
      _
    $region31: #{tpu_custom_call.1} parent=1 // pred_check_branch
      %37 = sbr.rel (0) target = $region33
    $region32: #{tpu_custom_call.1} parent=1 // pred_region
      %38 = dma.done [#allocation3], 128
    $region33: #{tpu_custom_call.1} parent=1 // pred_fallthru
      _
    %v40 = vld [vmem:[#allocation2] sm:$0xff]
    %v41 = vpack.c.bf16 %v40, %v40
    %v42 = vld [vmem:[%s1] sm:$0xf]
    %v43 = vld [vmem:[%s1 + $0x4] sm:$0xf]
    %v44 = vld [vmem:[%s1 + $0x8] sm:$0xf]
    %v45 = vld [vmem:[%s1 + $0xc] sm:$0xf]
    %v46 = vld [vmem:[%s2] sm:$0x1]
    %v48 = vlaneseq
    %v49 = vshrl.u32 %v48, 7
    %v50 = vsub.s32 0, %v49
    %v51 = vrot.slane %v46, %v50
    %v57 = vunpack.c.l.b16 %v42
    %v58 = vunpack.c.l.b16 %v43
    %v59 = vunpack.c.l.b16 %v44
    %v60 = vunpack.c.l.b16 %v45
    %v61 = vpack.c.b16 %v58, %v57
    %v62 = vpack.c.b16 %v60, %v59
    %vm65 = vcmask 261120
    %v67 = vsel %vm65, %v41, 0
    %69 = vmatprep.subr.bf16.mxu0 0
    %70 = vmatpush1.bf16.msra.mxu0 %v61
    %71 = vmatprep.subr.bf16.mxu0 0
    %72 = vmatpush1.bf16.msra.mxu0 %v62
    %73 = vmatprep.subr.bf16.mxu0 0
    %74 = vmatpush1.bf16.msra.mxu0 0
    %75 = vmatprep.subr.bf16.mxu0 0
    %76 = vmatpush1.bf16.msra.mxu0 0
    %77 = vmatprep.subr.bf16.mxu0 0
    %78 = vmatpush1.bf16.msra.mxu0 0
    %79 = vmatprep.subr.bf16.mxu0 0
    %80 = vmatpush1.bf16.msra.mxu0 0
    %81 = vmatprep.subr.bf16.mxu0 0
    %82 = vmatpush1.bf16.msra.mxu0 0
    %83 = vmatprep.subr.bf16.mxu0 0
    %84 = vmatpush1.bf16.msra.mxu0 0
    %85 = vmatprep.subr.bf16.mxu0 0
    %86 = vmatpush1.bf16.msra.mxu0 0
    %87 = vmatprep.subr.bf16.mxu0 0
    %88 = vmatpush1.bf16.msra.mxu0 0
    %89 = vmatprep.subr.bf16.mxu0 0
    %90 = vmatpush1.bf16.msra.mxu0 0
    %91 = vmatprep.subr.bf16.mxu0 0
    %92 = vmatpush1.bf16.msra.mxu0 0
    %93 = vmatprep.subr.bf16.mxu0 0
    %94 = vmatpush1.bf16.msra.mxu0 0
    %95 = vmatprep.subr.bf16.mxu0 0
    %96 = vmatpush1.bf16.msra.mxu0 0
    %97 = vmatprep.subr.bf16.mxu0 0
    %98 = vmatpush1.bf16.msra.mxu0 0
    %99 = vmatprep.subr.bf16.mxu0 0
    %100 = vmatpush1.bf16.msra.mxu0 0
    %101 = vmatprep.mubr.bf16.mxu0 0
    %102 = vmatmul.mubr.bf16.gmra.mrb[0].mxu0 %v67
    %v103 = vpop.f32.mrb[0].mxu0
    %v104 = vadd.f32 %v51, %v103
    %v105 = vpop.f32.mrb[0].mxu0
    %v106 = vpop.f32.mrb[0].mxu0
    %v107 = vpop.f32.mrb[0].mxu0
    %108 = vdwg.mxu0
    %v109 = vmax.f32 %v104, 0.0
    %v110 = vpack.c.bf16 %v109, %v109
    %v111 = vld [vmem:[%s3] sm:$0xf]
    %v112 = vld [vmem:[%s3 + $0x4] sm:$0xf]
    %v113 = vld [vmem:[%s3 + $0x8] sm:$0xf]
    %v114 = vld [vmem:[%s3 + $0xc] sm:$0xf]
    %v115 = vld [vmem:[%s3 + $0x10] sm:$0xf]
    %v116 = vld [vmem:[%s3 + $0x14] sm:$0xf]
    %v117 = vld [vmem:[%s3 + $0x18] sm:$0xf]
    %v118 = vld [vmem:[%s3 + $0x1c] sm:$0xf]
    %v119 = vld [vmem:[%s3 + $0x20] sm:$0xf]
    %v120 = vld [vmem:[%s3 + $0x24] sm:$0xf]
    %v121 = vld [vmem:[%s3 + $0x28] sm:$0xf]
    %v122 = vld [vmem:[%s3 + $0x2c] sm:$0xf]
    %v123 = vld [vmem:[%s3 + $0x30] sm:$0xf]
    %v124 = vld [vmem:[%s3 + $0x34] sm:$0xf]
    %v125 = vld [vmem:[%s3 + $0x38] sm:$0xf]
    %v126 = vld [vmem:[%s3 + $0x3c] sm:$0xf]
    %v127 = vld [vmem:[%s4] sm:$0x1]
    %v129 = vlaneseq
    %v130 = vshrl.u32 %v129, 7
    %v131 = vsub.s32 0, %v130
    %v132 = vrot.slane %v127, %v131
    %v150 = vunpack.c.l.b16 %v111
    %v151 = vunpack.c.l.b16 %v112
    %v152 = vunpack.c.l.b16 %v113
    %v153 = vunpack.c.l.b16 %v114
    %v154 = vunpack.c.l.b16 %v115
    %v155 = vunpack.c.l.b16 %v116
    %v156 = vunpack.c.l.b16 %v117
    %v157 = vunpack.c.l.b16 %v118
    %v158 = vunpack.c.l.b16 %v119
    %v159 = vunpack.c.l.b16 %v120
    %v160 = vunpack.c.l.b16 %v121
    %v161 = vunpack.c.l.b16 %v122
    %v162 = vunpack.c.l.b16 %v123
    %v163 = vunpack.c.l.b16 %v124
    %v164 = vunpack.c.l.b16 %v125
    %v165 = vunpack.c.l.b16 %v126
    %v166 = vpack.c.b16 %v151, %v150
    %v167 = vpack.c.b16 %v153, %v152
    %v168 = vpack.c.b16 %v155, %v154
    %v169 = vpack.c.b16 %v157, %v156
    %v170 = vpack.c.b16 %v159, %v158
    %v171 = vpack.c.b16 %v161, %v160
    %v172 = vpack.c.b16 %v163, %v162
    %v173 = vpack.c.b16 %v165, %v164
    %182 = vmatprep.subr.bf16.mxu0 0
    %183 = vmatpush1.bf16.msra.mxu0 %v166
    %184 = vmatprep.subr.bf16.mxu0 0
    %185 = vmatpush1.bf16.msra.mxu0 %v167
    %186 = vmatprep.subr.bf16.mxu0 0
    %187 = vmatpush1.bf16.msra.mxu0 %v168
    %188 = vmatprep.subr.bf16.mxu0 0
    %189 = vmatpush1.bf16.msra.mxu0 %v169
    %190 = vmatprep.subr.bf16.mxu0 0
    %191 = vmatpush1.bf16.msra.mxu0 %v170
    %192 = vmatprep.subr.bf16.mxu0 0
    %193 = vmatpush1.bf16.msra.mxu0 %v171
    %194 = vmatprep.subr.bf16.mxu0 0
    %195 = vmatpush1.bf16.msra.mxu0 %v172
    %196 = vmatprep.subr.bf16.mxu0 0
    %197 = vmatpush1.bf16.msra.mxu0 %v173
    %198 = vmatprep.subr.bf16.mxu0 0
    %199 = vmatpush1.bf16.msra.mxu0 0
    %200 = vmatprep.subr.bf16.mxu0 0
    %201 = vmatpush1.bf16.msra.mxu0 0
    %202 = vmatprep.subr.bf16.mxu0 0
    %203 = vmatpush1.bf16.msra.mxu0 0
    %204 = vmatprep.subr.bf16.mxu0 0
    %205 = vmatpush1.bf16.msra.mxu0 0
    %206 = vmatprep.subr.bf16.mxu0 0
    %207 = vmatpush1.bf16.msra.mxu0 0
    %208 = vmatprep.subr.bf16.mxu0 0
    %209 = vmatpush1.bf16.msra.mxu0 0
    %210 = vmatprep.subr.bf16.mxu0 0
    %211 = vmatpush1.bf16.msra.mxu0 0
    %212 = vmatprep.subr.bf16.mxu0 0
    %213 = vmatpush1.bf16.msra.mxu0 0
    %214 = vmatprep.mubr.bf16.mxu0 0
    %215 = vmatmul.mubr.bf16.gmra.mrb[0].mxu0 %v110
    %v216 = vpop.f32.mrb[0].mxu0
    %v217 = vadd.f32 %v132, %v216
    %v218 = vpop.f32.mrb[0].mxu0
    %v219 = vpop.f32.mrb[0].mxu0
    %v220 = vpop.f32.mrb[0].mxu0
    %221 = vdwg.mxu0
    %v222 = vmax.f32 %v217, 0.0
    %v223 = vpack.c.bf16 %v222, %v222
    %v224 = vld [vmem:[%s5] sm:$0xf]
    %v225 = vld [vmem:[%s5 + $0x4] sm:$0xf]
    %v226 = vld [vmem:[%s5 + $0x8] sm:$0xf]
    %v227 = vld [vmem:[%s5 + $0xc] sm:$0xf]
    %v228 = vld [vmem:[%s5 + $0x10] sm:$0xf]
    %v229 = vld [vmem:[%s5 + $0x14] sm:$0xf]
    %v230 = vld [vmem:[%s5 + $0x18] sm:$0xf]
    %v231 = vld [vmem:[%s5 + $0x1c] sm:$0xf]
    %v232 = vld [vmem:[%s5 + $0x20] sm:$0xf]
    %v233 = vld [vmem:[%s5 + $0x24] sm:$0xf]
    %v234 = vld [vmem:[%s5 + $0x28] sm:$0xf]
    %v235 = vld [vmem:[%s5 + $0x2c] sm:$0xf]
    %v236 = vld [vmem:[%s5 + $0x30] sm:$0xf]
    %v237 = vld [vmem:[%s5 + $0x34] sm:$0xf]
    %v238 = vld [vmem:[%s5 + $0x38] sm:$0xf]
    %v239 = vld [vmem:[%s5 + $0x3c] sm:$0xf]
    %v240 = vld [vmem:[%s6] sm:$0x1]
    %v242 = vlaneseq
    %v243 = vshrl.u32 %v242, 7
    %v244 = vsub.s32 0, %v243
    %v245 = vrot.slane %v240, %v244
    %v263 = vunpack.c.l.b16 %v224
    %v264 = vunpack.c.l.b16 %v225
    %v265 = vunpack.c.l.b16 %v226
    %v266 = vunpack.c.l.b16 %v227
    %v267 = vunpack.c.l.b16 %v228
    %v268 = vunpack.c.l.b16 %v229
    %v269 = vunpack.c.l.b16 %v230
    %v270 = vunpack.c.l.b16 %v231
    %v271 = vunpack.c.l.b16 %v232
    %v272 = vunpack.c.l.b16 %v233
    %v273 = vunpack.c.l.b16 %v234
    %v274 = vunpack.c.l.b16 %v235
    %v275 = vunpack.c.l.b16 %v236
    %v276 = vunpack.c.l.b16 %v237
    %v277 = vunpack.c.l.b16 %v238
    %v278 = vunpack.c.l.b16 %v239
    %v279 = vpack.c.b16 %v264, %v263
    %v280 = vpack.c.b16 %v266, %v265
    %v281 = vpack.c.b16 %v268, %v267
    %v282 = vpack.c.b16 %v270, %v269
    %v283 = vpack.c.b16 %v272, %v271
    %v284 = vpack.c.b16 %v274, %v273
    %v285 = vpack.c.b16 %v276, %v275
    %v286 = vpack.c.b16 %v278, %v277
    %295 = vmatprep.subr.bf16.mxu0 0
    %296 = vmatpush1.bf16.msra.mxu0 %v279
    %297 = vmatprep.subr.bf16.mxu0 0
    %298 = vmatpush1.bf16.msra.mxu0 %v280
    %299 = vmatprep.subr.bf16.mxu0 0
    %300 = vmatpush1.bf16.msra.mxu0 %v281
    %301 = vmatprep.subr.bf16.mxu0 0
    %302 = vmatpush1.bf16.msra.mxu0 %v282
    %303 = vmatprep.subr.bf16.mxu0 0
    %304 = vmatpush1.bf16.msra.mxu0 %v283
    %305 = vmatprep.subr.bf16.mxu0 0
    %306 = vmatpush1.bf16.msra.mxu0 %v284
    %307 = vmatprep.subr.bf16.mxu0 0
    %308 = vmatpush1.bf16.msra.mxu0 %v285
    %309 = vmatprep.subr.bf16.mxu0 0
    %310 = vmatpush1.bf16.msra.mxu0 %v286
    %311 = vmatprep.subr.bf16.mxu0 0
    %312 = vmatpush1.bf16.msra.mxu0 0
    %313 = vmatprep.subr.bf16.mxu0 0
    %314 = vmatpush1.bf16.msra.mxu0 0
    %315 = vmatprep.subr.bf16.mxu0 0
    %316 = vmatpush1.bf16.msra.mxu0 0
    %317 = vmatprep.subr.bf16.mxu0 0
    %318 = vmatpush1.bf16.msra.mxu0 0
    %319 = vmatprep.subr.bf16.mxu0 0
    %320 = vmatpush1.bf16.msra.mxu0 0
    %321 = vmatprep.subr.bf16.mxu0 0
    %322 = vmatpush1.bf16.msra.mxu0 0
    %323 = vmatprep.subr.bf16.mxu0 0
    %324 = vmatpush1.bf16.msra.mxu0 0
    %325 = vmatprep.subr.bf16.mxu0 0
    %326 = vmatpush1.bf16.msra.mxu0 0
    %327 = vmatprep.mubr.bf16.mxu0 0
    %328 = vmatmul.mubr.bf16.gmra.mrb[0].mxu0 %v223
    %v329 = vpop.f32.mrb[0].mxu0
    %v330 = vadd.f32 %v245, %v329
    %v331 = vpop.f32.mrb[0].mxu0
    %v332 = vpop.f32.mrb[0].mxu0
    %v333 = vpop.f32.mrb[0].mxu0
    %334 = vdwg.mxu0
    %vm335 = vcmask 146432
    %336 = vst.msk [vmem:[#allocation5] sm:$0xff] %vm335, %v330
    // Predicated region
    $region34: #{tpu_custom_call.1} parent=1 // pred_check
      _
    $region35: #{tpu_custom_call.1} parent=1 // pred_check_branch
      %338 = sbr.rel (0) target = $region37
    $region36: #{tpu_custom_call.1} parent=1 // pred_region
      %s340 = ssub.s32 128, 128
      %341 = vsyncadd [#allocation4], %s340
      %s343 = sshll.u32 [#allocation5], 4
      %s344 = int_to_ptr.vmem [resolvable:$true] %s343
      %346 = dma.vmem_to_hbm [thread:$0]  %s344, 128, %s7, [#allocation4]
    $region37: #{tpu_custom_call.1} parent=1 // pred_fallthru
      _
    // Predicated region
    $region38: #{tpu_custom_call.1} parent=1 // pred_check
      _
    $region39: #{tpu_custom_call.1} parent=1 // pred_check_branch
      %348 = sbr.rel (0) target = $region41
    $region40: #{tpu_custom_call.1} parent=1 // pred_region
      %349 = dma.done [#allocation4], 128
    $region41: #{tpu_custom_call.1} parent=1 // pred_fallthru
      _
    %350 = vsyncpa [#allocation3], 1
    %351 = vsyncpa [#allocation4], 1

</llo_original>
